<compile_context>
chip_gen: v6e
topology: v6e:2x2x1
jax: 0.10.0
libtpu: 0.0.40
codegen_flags: <defaults>
</compile_context>

<pallas_src>
import numpy as np
import jax
import jax.numpy as jnp
from jax.experimental import pallas as pl
from jax.experimental.pallas import tpu as pltpu


# ------------------------------ Pallas kernel ---------------------------------
def _pe_add_kernel(x_ref, pe_ref, out_ref):
    # x_ref:  (b_blk, t_blk, D)   current batch/time slab
    # pe_ref: (t_blk, D)          positional-encoding rows for this time slab
    out_ref[...] = x_ref[...] + pe_ref[...][None, :, :]


# ------------------------------ wrapper / glue ---------------------------------
def positional_encoding_forward(x, pe, *, b_blk=None, t_blk=None, donate_x=True):
    """out[b, t, :] = x[b, t, :] + pe[t, :]   (pe broadcast over batch)."""
    B, T, D = x.shape
    assert pe.ndim == 2 and pe.shape[0] >= T and pe.shape[1] == D, (pe.shape, x.shape)

    # Cast the table to the activation dtype once (no-op for f32; halves pe
    # HBM traffic for bf16 and keeps the in-kernel store dtype-matched).
    if pe.dtype != x.dtype:
        pe = pe.astype(x.dtype)

    itemsize = jnp.dtype(x.dtype).itemsize
    q = max(8, 32 // itemsize)  # sublane quantum: 8 (f32), 16 (bf16), 32 (int8/fp8)

    # ---------------- time tiling ----------------
    if t_blk is None:
        t_blk = min(T, 512)
    t_blk = max(1, min(t_blk, T))
    slice_pe = False
    if t_blk % q != 0:
        rounded = (t_blk // q) * q  # round DOWN to the sublane quantum
        if rounded >= q:
            t_blk = rounded
        else:
            # T smaller than one sublane quantum: use a full-T block and slice
            # pe so the block shape equals the full array dims.
            t_blk = T
            slice_pe = True
    if slice_pe:
        pe = pe[:T]

    # VMEM budget: conservative for v7x (64 MiB physical / 32 MiB scoped default).
    vmem_budget = 24 << 20
    # If even a single-batch-row slab (double-buffered x + out, plus pe block)
    # would overflow the budget, shrink the time tile.
    while t_blk > q and 6 * t_blk * D * itemsize > vmem_budget:
        t_blk = max(q, ((t_blk // 2) // q) * q)

    # ---------------- batch tiling ----------------
    row_bytes = t_blk * D * itemsize
    if b_blk is None:
        b_blk = max(1, (1 << 20) // row_bytes)  # ~1 MiB of x per grid step
    b_blk = max(1, min(b_blk, B))

    # Double-buffered x + out blocks (4 * blk) + double-buffered pe block (2 * blk).
    max_b = (vmem_budget // itemsize - 2 * t_blk * D) // (4 * t_blk * D)
    b_blk = max(1, min(b_blk, max_b))

    # Give both v7x TensorCores work when the batch allows it (free on 1-TC chips).
    if B >= 2 and pl.cdiv(T, t_blk) * pl.cdiv(B, b_blk) < 2:
        b_blk = pl.cdiv(B, 2)

    # T-blocks outer, B-blocks inner: the pe block index only depends on the
    # outer axis, so Pallas skips re-copying pe across the inner batch steps.
    grid = (pl.cdiv(T, t_blk), pl.cdiv(B, b_blk))

    return pl.pallas_call(
        _pe_add_kernel,
        out_shape=jax.ShapeDtypeStruct((B, T, D), x.dtype),
        grid=grid,
        in_specs=[
            pl.BlockSpec((b_blk, t_blk, D), lambda t, b: (b, t, 0)),
            pl.BlockSpec((t_blk, D), lambda t, b: (t, 0)),
        ],
        out_specs=pl.BlockSpec((b_blk, t_blk, D), lambda t, b: (b, t, 0)),
        input_output_aliases=({0: 0} if donate_x else {}),
        compiler_params=pltpu.CompilerParams(
            dimension_semantics=("parallel", "parallel"),
        ),
    )(x, pe)


# ------------------------------ PE table (host-side) ---------------------------
def make_positional_encoding(d_model, max_len=1000):
    """Same construction as the PyTorch module's registered buffer."""
    position = np.arange(max_len, dtype=np.float32)[:, None]
    div_term = np.exp(
        np.arange(0, d_model, 2, dtype=np.float32) * (-np.log(10000.0) / d_model)
    )
    pe = np.zeros((max_len, d_model), np.float32)
    pe[:, 0::2] = np.sin(position * div_term)
    pe[:, 1::2] = np.cos(position * div_term)
    return jnp.asarray(pe)


# ----------------------------------- main --------------------------------------
if __name__ == "__main__":
    B, T, D_MODEL, MAX_LEN = 8, 64, 128, 1000

    key = jax.random.PRNGKey(0)
    x = jax.random.normal(key, (B, T, D_MODEL), dtype=jnp.float32)
    pe = make_positional_encoding(D_MODEL, MAX_LEN)

    # pure-JAX reference (computed before the call; x is donated into the output)
    ref = x + pe[:T][None, :, :]

    out = positional_encoding_forward(x, pe)
    out = jax.block_until_ready(out)

    assert out.shape == (B, T, D_MODEL), out.shape
    assert bool(jnp.all(jnp.isfinite(out)))
    assert bool(jnp.allclose(out, ref, atol=1e-6, rtol=1e-6))

    # bf16 path: exercises the dtype-aware sublane quantum + pe pre-cast.
    x16 = jax.random.normal(jax.random.PRNGKey(1), (B, T, D_MODEL), dtype=jnp.bfloat16)
    ref16 = x16 + pe[:T].astype(jnp.bfloat16)[None, :, :]
    out16 = jax.block_until_ready(positional_encoding_forward(x16, pe))
    assert out16.dtype == jnp.bfloat16
    assert bool(jnp.allclose(out16.astype(jnp.float32), ref16.astype(jnp.float32),
                             atol=1e-2, rtol=1e-2))

    print("KERNEL_OK")
</pallas_src>

<mosaic_0001>
module attributes {stable_mosaic.version = 11 : i64} {
  func.func @_pe_add_kernel(%arg0: i32, %arg1: i32, %arg2: memref<4x64x128xf32, #tpu.memory_space<vmem>>, %arg3: memref<64x128xf32, #tpu.memory_space<vmem>>, %arg4: memref<4x64x128xf32, #tpu.memory_space<vmem>>) attributes {dimension_semantics = [#tpu.dimension_semantics<parallel>, #tpu.dimension_semantics<parallel>], iteration_bounds = array<i64: 1, 2>, scalar_prefetch = 0 : i64, scratch_operands = 0 : i64, tpu.core_type = #tpu.core_type<tc>, window_params = [{transform_indices = @transform_0, window_bounds = array<i64: 4, 64, 128>}, {transform_indices = @transform_1, window_bounds = array<i64: 64, 128>}, {transform_indices = @transform_2, window_bounds = array<i64: 4, 64, 128>}]} {
    %c0 = arith.constant 0 : index
    %c0_0 = arith.constant 0 : index
    %c0_1 = arith.constant 0 : index
    %0 = vector.load %arg2[%c0, %c0_0, %c0_1] : memref<4x64x128xf32, #tpu.memory_space<vmem>>, vector<4x64x128xf32>
    %c0_2 = arith.constant 0 : index
    %c0_3 = arith.constant 0 : index
    %1 = vector.load %arg3[%c0_2, %c0_3] : memref<64x128xf32, #tpu.memory_space<vmem>>, vector<64x128xf32>
    %2 = vector.shape_cast %1 : vector<64x128xf32> to vector<1x64x128xf32>
    %3 = vector.broadcast %2 : vector<1x64x128xf32> to vector<4x64x128xf32>
    %4 = arith.addf %0, %3 : vector<4x64x128xf32>
    %c0_4 = arith.constant 0 : index
    %c0_5 = arith.constant 0 : index
    %c0_6 = arith.constant 0 : index
    %5 = vector.load %arg4[%c0_4, %c0_5, %c0_6] : memref<4x64x128xf32, #tpu.memory_space<vmem>>, vector<4x64x128xf32>
    tpu.vector_store %arg4[%c0_4, %c0_5, %c0_6], %4 {strides = array<i32>} : memref<4x64x128xf32, #tpu.memory_space<vmem>>, vector<4x64x128xf32>,
    return
  }
  func.func @transform_0(%arg0: i32, %arg1: i32) -> (i32, i32, i32) {
    %c0_i32 = arith.constant 0 : i32
    %c0_i32_0 = arith.constant 0 : i32
    return %arg1, %arg0, %c0_i32 : i32, i32, i32
  }
  func.func @transform_1(%arg0: i32, %arg1: i32) -> (i32, i32) {
    %c0_i32 = arith.constant 0 : i32
    %c0_i32_0 = arith.constant 0 : i32
    return %arg0, %c0_i32 : i32, i32
  }
  func.func @transform_2(%arg0: i32, %arg1: i32) -> (i32, i32, i32) {
    %c0_i32 = arith.constant 0 : i32
    %c0_i32_0 = arith.constant 0 : i32
    return %arg1, %arg0, %c0_i32 : i32, i32, i32
  }
}

</mosaic_0001>

<llo_original>
// kernel: tpu_custom_call.1
$region0: #{tpu_custom_call.1}
  #allocation0 [shape = 'u32[]', space=smem, size = 0x4, offset = 0x4, fixed_abs, tag = 'smem constant byte address 0x4 - core index']
  #allocation1 [shape = 'u32[144,128]{1,0:T(1,128)}', space=vmem, size = 0x12000, scoped, tag = 'internal scratch']
  %s0 = inlined_call_operand.hbm [shape: f32[8,64,128], index: 0, kind: input, shape index: {}, may-alias: {0,2}]
  %s1 = inlined_call_operand.vmem [shape: f32[1000,128], index: 1, kind: input, shape index: {}]
  %s2 = inlined_call_operand.hbm [shape: f32[8,64,128], index: 2, kind: output, shape index: {}, may-alias: {0,2}]
  %s3 = sld [smem:[#allocation0]]
  $region45: #{tpu_custom_call.1} parent=0
    _
  %s5 = ssub.s32 1, %s3
  %s6 = scalar_select 0, %s5, %s3
  $region1: #{tpu_custom_call.1} parent=0
    #allocation2 [shape = 'u8[262144]{0}', space=vmem, size = 0x40000, scoped, tag = 'input window, operand 0']
    #allocation3 [shape = 's32[2]{0}', space=sflag, size = 0x8, scoped, tag = 'scoped memory for tpu_custom_call.1']
    #allocation4 [shape = 's32[2]{0}', space=sflag, size = 0x8, scoped, tag = 'scoped memory for tpu_custom_call.1']
    #allocation5 [shape = 'u8[262144]{0}', space=vmem, size = 0x40000, scoped, tag = 'output window, operand 0']
    %7 = vsyncpa [#allocation3], 0
    %s8 = scalar_lea.sflag [#allocation3], 1
    %9 = vsyncpa %s8, 0
    %10 = vsyncpa [#allocation4], 0
    %s11 = scalar_lea.sflag [#allocation4], 1
    %12 = vsyncpa %s11, 0
    loop: start=0, step=1, limit=4
    $region2: #{tpu_custom_call.1} parent=1 // loop_pre_header
      _
    $region3: #{tpu_custom_call.1} parent=1 // loop_header
      %s14 = sphi 0, %s18
      %p15 = scmp.ge.s32.totalorder %s14, 4
      %s21 = sphi 0, %s33
      %s22 = sphi 0, %s29
      %s23 = sphi 0, %s21
      %s24 = sphi 0, %s22
      %s25 = sphi 0, %s23
      %s26 = sphi 0, %s24
      %s38 = sphi 0, %s40
      %s41 = sphi 0, %s38
      %s42 = sphi 0, %s41
      %s58 = sphi 0, %s42
      %s64 = sphi 0, %s66
      %s67 = sphi 0, %s64
      %s68 = sphi 0, %s67
      %s84 = sphi 0, %s68
      %s92 = sphi 0, %s94
      %s95 = sphi 0, %s92
      %s96 = sphi 0, %s95
      %s112 = sphi 0, %s96
    $region4: #{tpu_custom_call.1} parent=1 // loop_header_branch
      %17 = sbr.rel (%p15) target = $region8
    $region5: #{tpu_custom_call.1} parent=1 // loop_body
      %s19 = ssub.s32 %s14, 1
      %s20 = ssub.s32 %s14, 2
      %s27 = sadd.s32 1, %s22
      %p28 = scmp.ge.s32.totalorder %s27, 2
      %s29 = scalar_select %p28, 0, %s27
      %s30 = sadd.s32 1, %s21
      %s31 = scalar_select %p28, %s30, %s21
      %p32 = scmp.ge.s32.totalorder %s31, 1
      %s33 = scalar_select %p32, 0, %s31
      %s34 = ssub.s32 %s22, %s29
      %s35 = ssub.s32 %s21, %s33
      %s36 = sor.u32 %s34, %s35
      %p37 = scmp.eq.s32.totalorder %s36, 0
      %s39 = sadd.s32 %s38, 1
      %s40 = scalar_select %p37, %s38, %s39
      %p43 = pneg %p37
      %p44 = scmp.eq.s32.totalorder %s14, 1
      %p45 = por %p43, %p44
      %p46 = scmp.ne.s32.totalorder %s38, %s41
      %p47 = scmp.eq.s32.totalorder %s14, 0
      %p48 = por %p46, %p47
      %p49 = scmp.ne.s32.totalorder %s38, %s41
      %p50 = scmp.eq.s32.totalorder %s19, 1
      %p51 = por %p49, %p50
      %p52 = scmp.ne.s32.totalorder %s41, %s42
      %p53 = scmp.eq.s32.totalorder %s19, 0
      %p54 = por %p52, %p53
      %p55 = scmp.ne.s32.totalorder %s41, %s42
      %p56 = scmp.eq.s32.totalorder %s20, 1
      %p57 = por %p55, %p56
      %p59 = scmp.ne.s32.totalorder %s42, %s58
      %p60 = scmp.eq.s32.totalorder %s20, 0
      %p61 = por %p59, %p60
      %s62 = ssub.s32 %s21, %s33
      %p63 = scmp.eq.s32.totalorder %s62, 0
      %s65 = sadd.s32 %s64, 1
      %s66 = scalar_select %p63, %s64, %s65
      %p69 = pneg %p63
      %p70 = scmp.eq.s32.totalorder %s14, 1
      %p71 = por %p69, %p70
      %p72 = scmp.ne.s32.totalorder %s64, %s67
      %p73 = scmp.eq.s32.totalorder %s14, 0
      %p74 = por %p72, %p73
      %p75 = scmp.ne.s32.totalorder %s64, %s67
      %p76 = scmp.eq.s32.totalorder %s19, 1
      %p77 = por %p75, %p76
      %p78 = scmp.ne.s32.totalorder %s67, %s68
      %p79 = scmp.eq.s32.totalorder %s19, 0
      %p80 = por %p78, %p79
      %p81 = scmp.ne.s32.totalorder %s67, %s68
      %p82 = scmp.eq.s32.totalorder %s20, 1
      %p83 = por %p81, %p82
      %p85 = scmp.ne.s32.totalorder %s68, %s84
      %p86 = scmp.eq.s32.totalorder %s20, 0
      %p87 = por %p85, %p86
      %s88 = ssub.s32 %s22, %s29
      %s89 = ssub.s32 %s21, %s33
      %s90 = sor.u32 %s88, %s89
      %p91 = scmp.eq.s32.totalorder %s90, 0
      %s93 = sadd.s32 %s92, 1
      %s94 = scalar_select %p91, %s92, %s93
      %p97 = pneg %p91
      %p98 = scmp.eq.s32.totalorder %s14, 1
      %p99 = por %p97, %p98
      %p100 = scmp.ne.s32.totalorder %s92, %s95
      %p101 = scmp.eq.s32.totalorder %s14, 0
      %p102 = por %p100, %p101
      %p103 = scmp.ne.s32.totalorder %s92, %s95
      %p104 = scmp.eq.s32.totalorder %s19, 1
      %p105 = por %p103, %p104
      %p106 = scmp.ne.s32.totalorder %s95, %s96
      %p107 = scmp.eq.s32.totalorder %s19, 0
      %p108 = por %p106, %p107
      %p109 = scmp.ne.s32.totalorder %s95, %s96
      %p110 = scmp.eq.s32.totalorder %s20, 1
      %p111 = por %p109, %p110
      %p113 = scmp.ne.s32.totalorder %s96, %s112
      %p114 = scmp.eq.s32.totalorder %s20, 0
      %p115 = por %p113, %p114
      %p116 = scmp.le.s32.totalorder 1, %s14
      %p117 = scmp.lt.s32.totalorder %s14, 3
      %p118 = pnand %p116, %p117
      %p119 = pneg %p118
      // Predicated region
      $region9: #{tpu_custom_call.1} parent=5 // pred_check
        _
      $region10: #{tpu_custom_call.1} parent=5 // pred_check_branch
        %121 = sbr.rel (%p118) target = $region12
      $region11: #{tpu_custom_call.1} parent=5 // pred_region
        %s122 = ssub.s32 %s14, 1
        // Predicated region
        $region13: #{tpu_custom_call.1} parent=11 // pred_check
          %p123 = pneg %p80
        $region14: #{tpu_custom_call.1} parent=11 // pred_check_branch
          %125 = sbr.rel (%p123) target = $region16
        $region15: #{tpu_custom_call.1} parent=11 // pred_region
          %s126 = smul.u32 8, %s23
          %s127 = ssub.s32 125, %s126
          %p128 = scmp.lt.s32.totalorder %s127, 8
          %s129 = scalar_select %p128, %s127, 8
          %s130 = smul.u32 128, %s129
          %p131 = scmp.lt.s32.totalorder %s126, 124
          %s132 = scalar_select %p131, %s126, 124
          %s133 = smul.addr %s132, 8
          %s134 = scalar_lea.vmem %s1, %s133
          %s135 = smul.u32 8, %s23
          %s136 = ssub.s32 125, %s135
          %p137 = scmp.lt.s32.totalorder %s136, 8
          %s138 = scalar_select %p137, %s136, 8
          %s139 = smul.u32 128, %s138
        $region16: #{tpu_custom_call.1} parent=11 // pred_fallthru
          _
      $region12: #{tpu_custom_call.1} parent=5 // pred_fallthru
        _
      %p140 = scmp.lt.s32.totalorder %s14, 2
      // Predicated region
      $region17: #{tpu_custom_call.1} parent=5 // pred_check
        %p141 = pneg %p140
      $region18: #{tpu_custom_call.1} parent=5 // pred_check_branch
        %143 = sbr.rel (%p141) target = $region20
      $region19: #{tpu_custom_call.1} parent=5 // pred_region
        // Predicated region
        $region21: #{tpu_custom_call.1} parent=19 // pred_check
          %p144 = pneg %p48
        $region22: #{tpu_custom_call.1} parent=19 // pred_check_branch
          %146 = sbr.rel (%p144) target = $region24
        $region23: #{tpu_custom_call.1} parent=19 // pred_region
          %s147 = sand.u32 %s38, 1
          %s148 = scalar_lea.sflag [#allocation3], %s147
          %s149 = sand.u32 %s38, 1
          %s150 = smul.addr %s149, 256
          %s151 = scalar_lea.vmem [#allocation2], %s150
          %s152 = smul.u32 4, %s22
          %s153 = smul.u32 8, %s21
          %s155 = ssub.s32 4096, 4096
          %156 = vsyncadd %s148, %s155
          %s157 = smul.addr %s152, 8
          %s158 = sadd.s32 %s153, %s157
          %s159 = smul.addr %s158, 128
          %s160 = scalar_lea.hbm %s0, %s159
          %s161 = sshll.u32 %s151, 4
          %s162 = int_to_ptr.vmem [resolvable:$true] %s161
          %167 = dma.hbm_to_vmem [thread:$0]  %s160, 4096, %s162, %s148, 128, 128, 8
        $region24: #{tpu_custom_call.1} parent=19 // pred_fallthru
          _
      $region20: #{tpu_custom_call.1} parent=5 // pred_fallthru
        _
      %p168 = scmp.le.s32.totalorder 1, %s14
      %p169 = scmp.lt.s32.totalorder %s14, 3
      %p170 = pnand %p168, %p169
      %p171 = pneg %p170
      // Predicated region
      $region25: #{tpu_custom_call.1} parent=5 // pred_check
        _
      $region26: #{tpu_custom_call.1} parent=5 // pred_check_branch
        %173 = sbr.rel (%p170) target = $region28
      $region27: #{tpu_custom_call.1} parent=5 // pred_region
        %s174 = ssub.s32 %s14, 1
        %s175 = sand.u32 %s41, 1
        %s176 = scalar_lea.sflag [#allocation3], %s175
        %s177 = sand.u32 %s41, 1
        %s178 = smul.addr %s177, 256
        %s179 = scalar_lea.vmem [#allocation2], %s178
        // Predicated region
        $region29: #{tpu_custom_call.1} parent=27 // pred_check
          %p180 = pneg %p54
        $region30: #{tpu_custom_call.1} parent=27 // pred_check_branch
          %182 = sbr.rel (%p180) target = $region32
        $region31: #{tpu_custom_call.1} parent=27 // pred_region
          %183 = dma.done %s176, 4096
        $region32: #{tpu_custom_call.1} parent=27 // pred_fallthru
          _
        %s184 = sand.u32 %s41, 1
        %s185 = scalar_lea.sflag [#allocation3], %s184
        %s186 = sand.u32 %s41, 1
        %s187 = smul.addr %s186, 256
        %s188 = scalar_lea.vmem [#allocation2], %s187
        %p189 = pneg %p54
        %p190 = pneg %p51
        %s191 = smul.u32 8, %s23
        %s192 = ssub.s32 125, %s191
        %p193 = scmp.lt.s32.totalorder %s192, 8
        %s194 = scalar_select %p193, %s192, 8
        %s195 = smul.u32 128, %s194
        %p196 = scmp.lt.s32.totalorder %s191, 124
        %s197 = scalar_select %p196, %s191, 124
        %s198 = smul.addr %s197, 8
        %s199 = scalar_lea.vmem %s1, %s198
        %p200 = pneg %p80
        %p201 = pneg %p77
        %p202 = pneg %p108
        %p203 = pneg %p105
        %s204 = sand.u32 %s95, 1
        %s205 = scalar_lea.sflag [#allocation4], %s204
        %s206 = sand.u32 %s95, 1
        %s207 = smul.addr %s206, 256
        %s208 = scalar_lea.vmem [#allocation5], %s207
        %s209 = smul.u32 4, %s24
        %s210 = smul.u32 8, %s23
        %s211 = smul.u32 8, %s23
        %s212 = ssub.s32 125, %s211
        %p213 = scmp.lt.s32.totalorder %s212, 8
        %s214 = scalar_select %p213, %s212, 8
        %s215 = smul.u32 128, %s214
        %p216 = scmp.lt.s32.totalorder %s211, 124
        %s217 = scalar_select %p216, %s211, 124
        %s218 = smul.addr %s217, 8
        %s219 = scalar_lea.vmem %s1, %s218
        %s220 = smul.u32 8, %s23
        %s221 = ssub.s32 125, %s220
        %p222 = scmp.lt.s32.totalorder %s221, 8
        %s223 = scalar_select %p222, %s221, 8
        %s224 = smul.u32 128, %s223
        %s225 = smul.u32 4, %s24
        %s226 = smul.u32 8, %s23
        %v227 = vld [vmem:[%s179] sm:$0xff]
        %v228 = vld [vmem:[%s179 + $0x8] sm:$0xff]
        %v229 = vld [vmem:[%s179 + $0x10] sm:$0xff]
        %v230 = vld [vmem:[%s179 + $0x18] sm:$0xff]
        %v231 = vld [vmem:[%s179 + $0x20] sm:$0xff]
        %v232 = vld [vmem:[%s179 + $0x28] sm:$0xff]
        %v233 = vld [vmem:[%s179 + $0x30] sm:$0xff]
        %v234 = vld [vmem:[%s179 + $0x38] sm:$0xff]
        %v235 = vld [vmem:[%s179 + $0x40] sm:$0xff]
        %v236 = vld [vmem:[%s179 + $0x48] sm:$0xff]
        %v237 = vld [vmem:[%s179 + $0x50] sm:$0xff]
        %v238 = vld [vmem:[%s179 + $0x58] sm:$0xff]
        %v239 = vld [vmem:[%s179 + $0x60] sm:$0xff]
        %v240 = vld [vmem:[%s179 + $0x68] sm:$0xff]
        %v241 = vld [vmem:[%s179 + $0x70] sm:$0xff]
        %v242 = vld [vmem:[%s179 + $0x78] sm:$0xff]
        %v243 = vld [vmem:[%s179 + $0x80] sm:$0xff]
        %v244 = vld [vmem:[%s179 + $0x88] sm:$0xff]
        %v245 = vld [vmem:[%s179 + $0x90] sm:$0xff]
        %v246 = vld [vmem:[%s179 + $0x98] sm:$0xff]
        %v247 = vld [vmem:[%s179 + $0xa0] sm:$0xff]
        %v248 = vld [vmem:[%s179 + $0xa8] sm:$0xff]
        %v249 = vld [vmem:[%s179 + $0xb0] sm:$0xff]
        %v250 = vld [vmem:[%s179 + $0xb8] sm:$0xff]
        %v251 = vld [vmem:[%s179 + $0xc0] sm:$0xff]
        %v252 = vld [vmem:[%s179 + $0xc8] sm:$0xff]
        %v253 = vld [vmem:[%s179 + $0xd0] sm:$0xff]
        %v254 = vld [vmem:[%s179 + $0xd8] sm:$0xff]
        %v255 = vld [vmem:[%s179 + $0xe0] sm:$0xff]
        %v256 = vld [vmem:[%s179 + $0xe8] sm:$0xff]
        %v257 = vld [vmem:[%s179 + $0xf0] sm:$0xff]
        %v258 = vld [vmem:[%s179 + $0xf8] sm:$0xff]
        %v259 = vld [vmem:[%s219] sm:$0xff]
        %v260 = vld [vmem:[%s219 + $0x8] sm:$0xff]
        %v261 = vld [vmem:[%s219 + $0x10] sm:$0xff]
        %v262 = vld [vmem:[%s219 + $0x18] sm:$0xff]
        %v263 = vld [vmem:[%s219 + $0x20] sm:$0xff]
        %v264 = vld [vmem:[%s219 + $0x28] sm:$0xff]
        %v265 = vld [vmem:[%s219 + $0x30] sm:$0xff]
        %v266 = vld [vmem:[%s219 + $0x38] sm:$0xff]
        %v267 = vadd.f32 %v227, %v259
        %v268 = vadd.f32 %v228, %v260
        %v269 = vadd.f32 %v229, %v261
        %v270 = vadd.f32 %v230, %v262
        %v271 = vadd.f32 %v231, %v263
        %v272 = vadd.f32 %v232, %v264
        %v273 = vadd.f32 %v233, %v265
        %v274 = vadd.f32 %v234, %v266
        %v275 = vadd.f32 %v235, %v259
        %v276 = vadd.f32 %v236, %v260
        %v277 = vadd.f32 %v237, %v261
        %v278 = vadd.f32 %v238, %v262
        %v279 = vadd.f32 %v239, %v263
        %v280 = vadd.f32 %v240, %v264
        %v281 = vadd.f32 %v241, %v265
        %v282 = vadd.f32 %v242, %v266
        %v283 = vadd.f32 %v243, %v259
        %v284 = vadd.f32 %v244, %v260
        %v285 = vadd.f32 %v245, %v261
        %v286 = vadd.f32 %v246, %v262
        %v287 = vadd.f32 %v247, %v263
        %v288 = vadd.f32 %v248, %v264
        %v289 = vadd.f32 %v249, %v265
        %v290 = vadd.f32 %v250, %v266
        %v291 = vadd.f32 %v251, %v259
        %v292 = vadd.f32 %v252, %v260
        %v293 = vadd.f32 %v253, %v261
        %v294 = vadd.f32 %v254, %v262
        %v295 = vadd.f32 %v255, %v263
        %v296 = vadd.f32 %v256, %v264
        %v297 = vadd.f32 %v257, %v265
        %v298 = vadd.f32 %v258, %v266
        %299 = vst [vmem:[%s208] sm:$0xff] %v267
        %300 = vst [vmem:[%s208 + $0x8] sm:$0xff] %v268
        %301 = vst [vmem:[%s208 + $0x10] sm:$0xff] %v269
        %302 = vst [vmem:[%s208 + $0x18] sm:$0xff] %v270
        %303 = vst [vmem:[%s208 + $0x20] sm:$0xff] %v271
        %304 = vst [vmem:[%s208 + $0x28] sm:$0xff] %v272
        %305 = vst [vmem:[%s208 + $0x30] sm:$0xff] %v273
        %306 = vst [vmem:[%s208 + $0x38] sm:$0xff] %v274
        %307 = vst [vmem:[%s208 + $0x40] sm:$0xff] %v275
        %308 = vst [vmem:[%s208 + $0x48] sm:$0xff] %v276
        %309 = vst [vmem:[%s208 + $0x50] sm:$0xff] %v277
        %310 = vst [vmem:[%s208 + $0x58] sm:$0xff] %v278
        %311 = vst [vmem:[%s208 + $0x60] sm:$0xff] %v279
        %312 = vst [vmem:[%s208 + $0x68] sm:$0xff] %v280
        %313 = vst [vmem:[%s208 + $0x70] sm:$0xff] %v281
        %314 = vst [vmem:[%s208 + $0x78] sm:$0xff] %v282
        %315 = vst [vmem:[%s208 + $0x80] sm:$0xff] %v283
        %316 = vst [vmem:[%s208 + $0x88] sm:$0xff] %v284
        %317 = vst [vmem:[%s208 + $0x90] sm:$0xff] %v285
        %318 = vst [vmem:[%s208 + $0x98] sm:$0xff] %v286
        %319 = vst [vmem:[%s208 + $0xa0] sm:$0xff] %v287
        %320 = vst [vmem:[%s208 + $0xa8] sm:$0xff] %v288
        %321 = vst [vmem:[%s208 + $0xb0] sm:$0xff] %v289
        %322 = vst [vmem:[%s208 + $0xb8] sm:$0xff] %v290
        %323 = vst [vmem:[%s208 + $0xc0] sm:$0xff] %v291
        %324 = vst [vmem:[%s208 + $0xc8] sm:$0xff] %v292
        %325 = vst [vmem:[%s208 + $0xd0] sm:$0xff] %v293
        %326 = vst [vmem:[%s208 + $0xd8] sm:$0xff] %v294
        %327 = vst [vmem:[%s208 + $0xe0] sm:$0xff] %v295
        %328 = vst [vmem:[%s208 + $0xe8] sm:$0xff] %v296
        %329 = vst [vmem:[%s208 + $0xf0] sm:$0xff] %v297
        %330 = vst [vmem:[%s208 + $0xf8] sm:$0xff] %v298
        %s331 = sand.u32 %s95, 1
        %s332 = scalar_lea.sflag [#allocation4], %s331
        %s333 = sand.u32 %s95, 1
        %s334 = smul.addr %s333, 256
        %s335 = scalar_lea.vmem [#allocation5], %s334
        // Predicated region
        $region33: #{tpu_custom_call.1} parent=27 // pred_check
          %p336 = pneg %p105
        $region34: #{tpu_custom_call.1} parent=27 // pred_check_branch
          %338 = sbr.rel (%p336) target = $region36
        $region35: #{tpu_custom_call.1} parent=27 // pred_region
          %s339 = smul.u32 4, %s24
          %s340 = smul.u32 8, %s23
          %s342 = ssub.s32 4096, 4096
          %343 = vsyncadd %s332, %s342
          %s344 = smul.addr %s339, 8
          %s345 = sadd.s32 %s340, %s344
          %s346 = smul.addr %s345, 128
          %s347 = scalar_lea.hbm %s2, %s346
          %s348 = sshll.u32 %s335, 4
          %s349 = int_to_ptr.vmem [resolvable:$true] %s348
          %354 = dma.vmem_to_hbm [thread:$0]  %s349, 4096, %s347, %s332, 128, 128, 8
        $region36: #{tpu_custom_call.1} parent=27 // pred_fallthru
          _
      $region28: #{tpu_custom_call.1} parent=5 // pred_fallthru
        _
      %p355 = scmp.le.s32.totalorder 2, %s14
      // Predicated region
      $region37: #{tpu_custom_call.1} parent=5 // pred_check
        %p356 = pneg %p355
      $region38: #{tpu_custom_call.1} parent=5 // pred_check_branch
        %358 = sbr.rel (%p356) target = $region40
      $region39: #{tpu_custom_call.1} parent=5 // pred_region
        %s359 = ssub.s32 %s14, 2
        // Predicated region
        $region41: #{tpu_custom_call.1} parent=39 // pred_check
          %p360 = pneg %p111
        $region42: #{tpu_custom_call.1} parent=39 // pred_check_branch
          %362 = sbr.rel (%p360) target = $region44
        $region43: #{tpu_custom_call.1} parent=39 // pred_region
          %s363 = sand.u32 %s96, 1
          %s364 = scalar_lea.sflag [#allocation4], %s363
          %s365 = sand.u32 %s96, 1
          %s366 = smul.addr %s365, 256
          %s367 = scalar_lea.vmem [#allocation5], %s366
          %368 = dma.done %s364, 4096
        $region44: #{tpu_custom_call.1} parent=39 // pred_fallthru
          _
      $region40: #{tpu_custom_call.1} parent=5 // pred_fallthru
        _
    $region6: #{tpu_custom_call.1} parent=1 // loop_footer
      %s18 = sadd.s32 1, %s14
    $region7: #{tpu_custom_call.1} parent=1 // loop_footer_branch
      %13 = sbr.rel target = $region3
    $region8: #{tpu_custom_call.1} parent=1 // loop_exit
      _
    %369 = vsyncpa [#allocation3], 1
    %s370 = scalar_lea.sflag [#allocation3], 1
    %371 = vsyncpa %s370, 1
    %372 = vsyncpa [#allocation4], 1
    %s373 = scalar_lea.sflag [#allocation4], 1
    %374 = vsyncpa %s373, 1

</llo_original>
